<compile_context>
chip_gen: v5e
topology: v5e:2x2
jax: 0.10.0
libtpu: 0.0.40
codegen_flags: <defaults>
</compile_context>

<pallas_src>
import functools

import jax
import jax.numpy as jnp
from jax import lax
from jax.experimental import pallas as pl
from jax.experimental.pallas import tpu as pltpu


def _round_up(n, m):
    return ((n + m - 1) // m) * m


def _critic_kernel(x_ref, w1_ref, b1_ref, w2_ref, b2_ref, w3t_ref, b3_ref, o_ref):
    # Layer 1: [tb, S](bf16) @ [S, 128](bf16) -> f32 accumulate; bias + ReLU in f32.
    h1 = jnp.dot(x_ref[...], w1_ref[...], preferred_element_type=jnp.float32)
    h1 = jnp.maximum(h1 + b1_ref[...], 0.0)
    # Layer 2: [tb, 128] @ [128, 128] (bf16 operands, f32 acc), bias + ReLU in f32.
    h2 = jnp.dot(h1.astype(jnp.bfloat16), w2_ref[...],
                 preferred_element_type=jnp.float32)
    h2 = jnp.maximum(h2 + b2_ref[...], 0.0)
    # Layer 3 (value head), lane-dense: contract feature dim of (1,128) W3^T with
    # (tb,128) h2 -> (1, tb) row (same q@k^T dot_general pattern as flash attn).
    v = lax.dot_general(
        w3t_ref[...], h2.astype(jnp.bfloat16),
        dimension_numbers=(((1,), (1,)), ((), ())),
        preferred_element_type=jnp.float32,
    )
    o_ref[...] = (v + b3_ref[...]).astype(o_ref.dtype)


@functools.partial(jax.jit, static_argnames=("block_b",))
def critic_forward(x, w1, b1, w2, b2, w3, b3, *, block_b=512):
    """Fused 3-layer MLP value network.  x: [B, state_dim] -> [B, 1] (f32)."""
    B, S = x.shape
    H = w1.shape[1]

    # Batch tile: one tile if the whole batch fits, otherwise 128-aligned tiles
    # (keeps the lane-dense output full-width). Ragged last tile -> zero padding.
    if B <= block_b:
        block = _round_up(B, 8)
    else:
        block = _round_up(block_b, 128)
    b_pad = _round_up(B, block)
    num_blocks = b_pad // block

    # bf16 MXU operands (accumulation stays f32 inside the kernel); halves the x
    # DMA bytes. Biases stay f32. W3 is pre-transposed to (1, H) for the
    # lane-dense value head.
    xb = jnp.pad(x.astype(jnp.bfloat16), ((0, b_pad - B), (0, 0)))
    w1b = w1.astype(jnp.bfloat16)
    w2b = w2.astype(jnp.bfloat16)
    w3t = w3.T.astype(jnp.bfloat16)  # (1, H)

    # Constant index_map => Pallas keeps these resident, no per-step re-DMA.
    full = lambda shape: pl.BlockSpec(shape, lambda i: (0, 0))

    cost = pl.CostEstimate(
        flops=2 * b_pad * (S * H + H * H + H),
        transcendentals=0,
        bytes_accessed=(b_pad * S * 2 + b_pad * 4            # x (bf16) in, values (f32) out
                        + (S * H + H * H + H) * 2            # bf16 weights
                        + (2 * H + 1) * 4),                  # f32 biases
    )

    out = pl.pallas_call(
        _critic_kernel,
        out_shape=jax.ShapeDtypeStruct((num_blocks, block), jnp.float32),
        grid_spec=pltpu.PrefetchScalarGridSpec(
            num_scalar_prefetch=0,
            grid=(num_blocks,),
            in_specs=[
                pl.BlockSpec((block, S), lambda i: (i, 0)),  # x tile (bf16)
                full((S, H)),   # w1   (bf16)
                full((1, H)),   # b1   (f32)
                full((H, H)),   # w2   (bf16)
                full((1, H)),   # b2   (f32)
                full((1, H)),   # w3^T (bf16)
                full((1, 1)),   # b3   (f32)
            ],
            out_specs=pl.BlockSpec((1, block), lambda i: (i, 0)),  # lane-dense row
        ),
        compiler_params=pltpu.CompilerParams(
            # Batch-tile axis is independent -> v7x can split it across its 2 TCs.
            dimension_semantics=("parallel",),
        ),
        cost_estimate=cost,
    )(xb, w1b, b1, w2b, b2, w3t, b3)

    # (num_blocks, block) lane-dense slab -> (B, 1) values (drop padding rows).
    return out.reshape(-1)[:B].reshape(B, 1)


def _init_params(key, state_dim, hidden=128):
    """Deterministic synthetic params (Kaiming-uniform-ish), stored as (in, out)."""
    k1, k2, k3, k4, k5, k6 = jax.random.split(key, 6)

    def lin(kw, kb, fan_in, fan_out):
        bound = 1.0 / jnp.sqrt(fan_in)
        w = jax.random.uniform(kw, (fan_in, fan_out), jnp.float32, -bound, bound)
        b = jax.random.uniform(kb, (1, fan_out), jnp.float32, -bound, bound)
        return w, b

    w1, b1 = lin(k1, k2, state_dim, hidden)
    w2, b2 = lin(k3, k4, hidden, hidden)
    w3, b3 = lin(k5, k6, hidden, 1)
    return w1, b1, w2, b2, w3, b3


def _reference(x, w1, b1, w2, b2, w3, b3):
    h1 = jnp.maximum(x @ w1 + b1, 0.0)
    h2 = jnp.maximum(h1 @ w2 + b2, 0.0)
    return h2 @ w3 + b3


if __name__ == "__main__":
    key = jax.random.PRNGKey(0)
    k_params, k_x1, k_x2 = jax.random.split(key, 3)

    state_dim = 16
    params = _init_params(k_params, state_dim)

    # Small smoke test (single tile).
    x_small = jax.random.normal(k_x1, (8, state_dim), jnp.float32)
    out_small = jax.block_until_ready(critic_forward(x_small, *params))
    ref_small = _reference(x_small, *params)
    assert out_small.shape == (8, 1), out_small.shape
    # bf16 operands -> relaxed tolerance vs the f32 reference.
    assert jnp.allclose(out_small, ref_small, atol=5e-2, rtol=5e-2), \
        "small-batch mismatch vs reference"

    # Ragged multi-tile batch: exercises grid > 1 and last-tile padding.
    x_big = jax.random.normal(k_x2, (600, state_dim), jnp.float32)
    out_big = jax.block_until_ready(critic_forward(x_big, *params, block_b=256))
    ref_big = _reference(x_big, *params)
    assert out_big.shape == (600, 1), out_big.shape
    assert jnp.allclose(out_big, ref_big, atol=5e-2, rtol=5e-2), \
        "ragged-batch mismatch vs reference"

    print("KERNEL_OK")
</pallas_src>

<mosaic_0001>
module attributes {stable_mosaic.version = 11 : i64} {
  func.func @_critic_kernel(%arg0: i32, %arg1: memref<8x16xbf16, #tpu.memory_space<vmem>>, %arg2: memref<16x128xbf16, #tpu.memory_space<vmem>>, %arg3: memref<1x128xf32, #tpu.memory_space<vmem>>, %arg4: memref<128x128xbf16, #tpu.memory_space<vmem>>, %arg5: memref<1x128xf32, #tpu.memory_space<vmem>>, %arg6: memref<1x128xbf16, #tpu.memory_space<vmem>>, %arg7: memref<1x1xf32, #tpu.memory_space<vmem>>, %arg8: memref<1x8xf32, #tpu.memory_space<vmem>>) attributes {dimension_semantics = [#tpu.dimension_semantics<parallel>], iteration_bounds = array<i64: 1>, scalar_prefetch = 0 : i64, scratch_operands = 0 : i64, tpu.core_type = #tpu.core_type<tc>, window_params = [{transform_indices = @transform_0, window_bounds = array<i64: 8, 16>}, {pipeline_mode = #tpu.pipeline_mode<synchronous>, transform_indices = @transform_1, window_bounds = array<i64: 16, 128>}, {pipeline_mode = #tpu.pipeline_mode<synchronous>, transform_indices = @transform_2, window_bounds = array<i64: 1, 128>}, {pipeline_mode = #tpu.pipeline_mode<synchronous>, transform_indices = @transform_3, window_bounds = array<i64: 128, 128>}, {pipeline_mode = #tpu.pipeline_mode<synchronous>, transform_indices = @transform_4, window_bounds = array<i64: 1, 128>}, {pipeline_mode = #tpu.pipeline_mode<synchronous>, transform_indices = @transform_5, window_bounds = array<i64: 1, 128>}, {pipeline_mode = #tpu.pipeline_mode<synchronous>, transform_indices = @transform_6, window_bounds = array<i64: 1, 1>}, {transform_indices = @transform_7, window_bounds = array<i64: 1, 8>}]} {
    %c0 = arith.constant 0 : index
    %c0_0 = arith.constant 0 : index
    %0 = vector.load %arg1[%c0, %c0_0] : memref<8x16xbf16, #tpu.memory_space<vmem>>, vector<8x16xbf16>
    %c0_1 = arith.constant 0 : index
    %c0_2 = arith.constant 0 : index
    %1 = vector.load %arg2[%c0_1, %c0_2] : memref<16x128xbf16, #tpu.memory_space<vmem>>, vector<16x128xbf16>
    %cst = arith.constant dense<0.000000e+00> : vector<8x128xf32>
    %2 = tpu.matmul %0, %1, %cst {dimension_numbers = #tpu.dot_dimension_numbers<[1], [0], [0], [1], [0, 0, 1, 1], [], []>} : vector<8x16xbf16>, vector<16x128xbf16>, vector<8x128xf32> -> vector<8x128xf32>
    %c0_3 = arith.constant 0 : index
    %c0_4 = arith.constant 0 : index
    %3 = vector.load %arg3[%c0_3, %c0_4] : memref<1x128xf32, #tpu.memory_space<vmem>>, vector<1x128xf32>
    %4 = vector.broadcast %3 : vector<1x128xf32> to vector<8x128xf32>
    %5 = arith.addf %2, %4 : vector<8x128xf32>
    %cst_5 = arith.constant 0.000000e+00 : f32
    %6 = vector.broadcast %cst_5 : f32 to vector<8x128xf32>
    %7 = arith.maximumf %5, %6 : vector<8x128xf32>
    %8 = arith.truncf %7 : vector<8x128xf32> to vector<8x128xbf16>
    %c0_6 = arith.constant 0 : index
    %c0_7 = arith.constant 0 : index
    %9 = vector.load %arg4[%c0_6, %c0_7] : memref<128x128xbf16, #tpu.memory_space<vmem>>, vector<128x128xbf16>
    %cst_8 = arith.constant dense<0.000000e+00> : vector<8x128xf32>
    %10 = tpu.matmul %8, %9, %cst_8 {dimension_numbers = #tpu.dot_dimension_numbers<[1], [0], [0], [1], [0, 0, 1, 1], [], []>} : vector<8x128xbf16>, vector<128x128xbf16>, vector<8x128xf32> -> vector<8x128xf32>
    %c0_9 = arith.constant 0 : index
    %c0_10 = arith.constant 0 : index
    %11 = vector.load %arg5[%c0_9, %c0_10] : memref<1x128xf32, #tpu.memory_space<vmem>>, vector<1x128xf32>
    %12 = vector.broadcast %11 : vector<1x128xf32> to vector<8x128xf32>
    %13 = arith.addf %10, %12 : vector<8x128xf32>
    %cst_11 = arith.constant 0.000000e+00 : f32
    %14 = vector.broadcast %cst_11 : f32 to vector<8x128xf32>
    %15 = arith.maximumf %13, %14 : vector<8x128xf32>
    %c0_12 = arith.constant 0 : index
    %c0_13 = arith.constant 0 : index
    %16 = vector.load %arg6[%c0_12, %c0_13] : memref<1x128xbf16, #tpu.memory_space<vmem>>, vector<1x128xbf16>
    %17 = arith.truncf %15 : vector<8x128xf32> to vector<8x128xbf16>
    %cst_14 = arith.constant dense<0.000000e+00> : vector<1x8xf32>
    %18 = tpu.matmul %16, %17, %cst_14 {dimension_numbers = #tpu.dot_dimension_numbers<[1], [1], [0], [0], [0, 0, 1, 0], [], []>} : vector<1x128xbf16>, vector<8x128xbf16>, vector<1x8xf32> -> vector<1x8xf32>
    %c0_15 = arith.constant 0 : index
    %c0_16 = arith.constant 0 : index
    %19 = vector.load %arg7[%c0_15, %c0_16] : memref<1x1xf32, #tpu.memory_space<vmem>>, vector<1x1xf32>
    %20 = vector.broadcast %19 : vector<1x1xf32> to vector<1x8xf32>
    %21 = arith.addf %18, %20 : vector<1x8xf32>
    %c0_17 = arith.constant 0 : index
    %c0_18 = arith.constant 0 : index
    %22 = vector.load %arg8[%c0_17, %c0_18] : memref<1x8xf32, #tpu.memory_space<vmem>>, vector<1x8xf32>
    tpu.vector_store %arg8[%c0_17, %c0_18], %21 {strides = array<i32>} : memref<1x8xf32, #tpu.memory_space<vmem>>, vector<1x8xf32>,
    return
  }
  func.func @transform_0(%arg0: i32) -> (i32, i32) {
    %c0_i32 = arith.constant 0 : i32
    %c0_i32_0 = arith.constant 0 : i32
    return %arg0, %c0_i32 : i32, i32
  }
  func.func @transform_1(%arg0: i32) -> (i32, i32) {
    %c0_i32 = arith.constant 0 : i32
    %c0_i32_0 = arith.constant 0 : i32
    %c0_i32_1 = arith.constant 0 : i32
    return %c0_i32, %c0_i32_0 : i32, i32
  }
  func.func @transform_2(%arg0: i32) -> (i32, i32) {
    %c0_i32 = arith.constant 0 : i32
    %c0_i32_0 = arith.constant 0 : i32
    %c0_i32_1 = arith.constant 0 : i32
    return %c0_i32, %c0_i32_0 : i32, i32
  }
  func.func @transform_3(%arg0: i32) -> (i32, i32) {
    %c0_i32 = arith.constant 0 : i32
    %c0_i32_0 = arith.constant 0 : i32
    %c0_i32_1 = arith.constant 0 : i32
    return %c0_i32, %c0_i32_0 : i32, i32
  }
  func.func @transform_4(%arg0: i32) -> (i32, i32) {
    %c0_i32 = arith.constant 0 : i32
    %c0_i32_0 = arith.constant 0 : i32
    %c0_i32_1 = arith.constant 0 : i32
    return %c0_i32, %c0_i32_0 : i32, i32
  }
  func.func @transform_5(%arg0: i32) -> (i32, i32) {
    %c0_i32 = arith.constant 0 : i32
    %c0_i32_0 = arith.constant 0 : i32
    %c0_i32_1 = arith.constant 0 : i32
    return %c0_i32, %c0_i32_0 : i32, i32
  }
  func.func @transform_6(%arg0: i32) -> (i32, i32) {
    %c0_i32 = arith.constant 0 : i32
    %c0_i32_0 = arith.constant 0 : i32
    %c0_i32_1 = arith.constant 0 : i32
    return %c0_i32, %c0_i32_0 : i32, i32
  }
  func.func @transform_7(%arg0: i32) -> (i32, i32) {
    %c0_i32 = arith.constant 0 : i32
    %c0_i32_0 = arith.constant 0 : i32
    return %arg0, %c0_i32 : i32, i32
  }
}

</mosaic_0001>

<llo_original>
// kernel: critic_forward.1
$region0: #{critic_forward.1}
  #allocation0 [shape = 'u32[]', space=smem, size = 0x4, offset = 0x4, fixed_abs, tag = 'smem constant byte address 0x4 - core index']
  #allocation1 [shape = 'u32[72,128]{1,0:T(1,128)}', space=vmem, size = 0x9000, scoped, tag = 'internal scratch']
  #allocation2 [shape = 'f32[1,1]{1,0:T(1,128)S(1)}', space=vmem, size = 0x200, scoped, tag = 'scoped memory for critic_forward.1']
  %s0 = inlined_call_operand.vmem [shape: bf16[8,16], index: 0, kind: input, shape index: {}]
  %s1 = inlined_call_operand.vmem [shape: bf16[16,128], index: 1, kind: input, shape index: {}]
  %s2 = inlined_call_operand.vmem [shape: f32[1,128], index: 2, kind: input, shape index: {}]
  %s3 = inlined_call_operand.vmem [shape: bf16[128,128], index: 3, kind: input, shape index: {}]
  %s4 = inlined_call_operand.vmem [shape: f32[1,128], index: 4, kind: input, shape index: {}]
  %s5 = inlined_call_operand.vmem [shape: bf16[1,128], index: 5, kind: input, shape index: {}]
  %s6 = inlined_call_operand.<no memory space> [shape: f32[1,1], index: 6, kind: input, shape index: {}]
  %s7 = inlined_call_operand.hbm [shape: f32[1,8], index: 7, kind: output, shape index: {}]
  %s8 = sld [smem:[#allocation0]]
  $region38: #{critic_forward.1} parent=0
    _
  %s10 = ssub.s32 1, %s8
  %s11 = scalar_select 0, %s10, %s8
  %v12 = vstv %s6
  %13 = vst [vmem:[#allocation2] sm:$0x1] %v12
  $region1: #{critic_forward.1} parent=0
    #allocation3 [shape = 'u8[512]{0}', space=vmem, size = 0x400, scoped, tag = 'output window, operand 0, single buffered']
    #allocation4 [shape = 's32[1]{0}', space=sflag, size = 0x4, scoped, tag = 'scoped memory for critic_forward.1']
    %14 = vsyncpa [#allocation4], 0
    // Predicated region
    $region2: #{critic_forward.1} parent=1 // pred_check
      _
    $region3: #{critic_forward.1} parent=1 // pred_check_branch
      %16 = sbr.rel (0) target = $region5
    $region4: #{critic_forward.1} parent=1 // pred_region
      _
    $region5: #{critic_forward.1} parent=1 // pred_fallthru
      _
    // Predicated region
    $region6: #{critic_forward.1} parent=1 // pred_check
      _
    $region7: #{critic_forward.1} parent=1 // pred_check_branch
      %18 = sbr.rel (0) target = $region9
    $region8: #{critic_forward.1} parent=1 // pred_region
      _
    $region9: #{critic_forward.1} parent=1 // pred_fallthru
      _
    // Predicated region
    $region10: #{critic_forward.1} parent=1 // pred_check
      _
    $region11: #{critic_forward.1} parent=1 // pred_check_branch
      %20 = sbr.rel (0) target = $region13
    $region12: #{critic_forward.1} parent=1 // pred_region
      _
    $region13: #{critic_forward.1} parent=1 // pred_fallthru
      _
    // Predicated region
    $region14: #{critic_forward.1} parent=1 // pred_check
      _
    $region15: #{critic_forward.1} parent=1 // pred_check_branch
      %22 = sbr.rel (0) target = $region17
    $region16: #{critic_forward.1} parent=1 // pred_region
      _
    $region17: #{critic_forward.1} parent=1 // pred_fallthru
      _
    // Predicated region
    $region18: #{critic_forward.1} parent=1 // pred_check
      _
    $region19: #{critic_forward.1} parent=1 // pred_check_branch
      %24 = sbr.rel (0) target = $region21
    $region20: #{critic_forward.1} parent=1 // pred_region
      _
    $region21: #{critic_forward.1} parent=1 // pred_fallthru
      _
    // Predicated region
    $region22: #{critic_forward.1} parent=1 // pred_check
      _
    $region23: #{critic_forward.1} parent=1 // pred_check_branch
      %26 = sbr.rel (0) target = $region25
    $region24: #{critic_forward.1} parent=1 // pred_region
      _
    $region25: #{critic_forward.1} parent=1 // pred_fallthru
      _
    // Predicated region
    $region26: #{critic_forward.1} parent=1 // pred_check
      _
    $region27: #{critic_forward.1} parent=1 // pred_check_branch
      %28 = sbr.rel (0) target = $region29
    $region28: #{critic_forward.1} parent=1 // pred_region
      _
    $region29: #{critic_forward.1} parent=1 // pred_fallthru
      _
    %v30 = vld [vmem:[%s0] sm:$0xf]
    %v31 = vld [vmem:[%s1] sm:$0xf]
    %v32 = vld [vmem:[%s1 + $0x4] sm:$0xf]
    %v33 = vld [vmem:[%s2] sm:$0x1]
    %v35 = vperm.slane %v33, 0
    %v39 = vunpack.c.l.b16 %v31
    %v40 = vunpack.c.l.b16 %v32
    %v41 = vpack.c.b16 %v40, %v39
    %vm43 = vcmask 130048
    %v45 = vsel %vm43, %v30, 0
    %47 = vmatpush.bf16.msra.mxu0 0
    %48 = vmatpush.bf16.msra.mxu0 0
    %49 = vmatpush.bf16.msra.mxu0 0
    %50 = vmatpush.bf16.msra.mxu0 0
    %51 = vmatpush.bf16.msra.mxu0 0
    %52 = vmatpush.bf16.msra.mxu0 0
    %53 = vmatpush.bf16.msra.mxu0 0
    %54 = vmatpush.bf16.msra.mxu0 %v41
    %55 = vmatmul.bf16.gmra.mxu0 %v45
    %v56 = vpop.f32.mrf.mxu0
    %v57 = vadd.f32 %v35, %v56
    %v58 = vpop.f32.mrf.mxu0
    %59 = vdwg.mxu0
    %v60 = vmax.f32 %v57, 0.0
    %v61 = vpack.c.bf16 %v60, %v60
    %v62 = vld [vmem:[%s3] sm:$0xf]
    %v63 = vld [vmem:[%s3 + $0x4] sm:$0xf]
    %v64 = vld [vmem:[%s3 + $0x8] sm:$0xf]
    %v65 = vld [vmem:[%s3 + $0xc] sm:$0xf]
    %v66 = vld [vmem:[%s3 + $0x10] sm:$0xf]
    %v67 = vld [vmem:[%s3 + $0x14] sm:$0xf]
    %v68 = vld [vmem:[%s3 + $0x18] sm:$0xf]
    %v69 = vld [vmem:[%s3 + $0x1c] sm:$0xf]
    %v70 = vld [vmem:[%s3 + $0x20] sm:$0xf]
    %v71 = vld [vmem:[%s3 + $0x24] sm:$0xf]
    %v72 = vld [vmem:[%s3 + $0x28] sm:$0xf]
    %v73 = vld [vmem:[%s3 + $0x2c] sm:$0xf]
    %v74 = vld [vmem:[%s3 + $0x30] sm:$0xf]
    %v75 = vld [vmem:[%s3 + $0x34] sm:$0xf]
    %v76 = vld [vmem:[%s3 + $0x38] sm:$0xf]
    %v77 = vld [vmem:[%s3 + $0x3c] sm:$0xf]
    %v78 = vld [vmem:[%s4] sm:$0x1]
    %v80 = vperm.slane %v78, 0
    %v98 = vunpack.c.l.b16 %v62
    %v99 = vunpack.c.l.b16 %v63
    %v100 = vunpack.c.l.b16 %v64
    %v101 = vunpack.c.l.b16 %v65
    %v102 = vunpack.c.l.b16 %v66
    %v103 = vunpack.c.l.b16 %v67
    %v104 = vunpack.c.l.b16 %v68
    %v105 = vunpack.c.l.b16 %v69
    %v106 = vunpack.c.l.b16 %v70
    %v107 = vunpack.c.l.b16 %v71
    %v108 = vunpack.c.l.b16 %v72
    %v109 = vunpack.c.l.b16 %v73
    %v110 = vunpack.c.l.b16 %v74
    %v111 = vunpack.c.l.b16 %v75
    %v112 = vunpack.c.l.b16 %v76
    %v113 = vunpack.c.l.b16 %v77
    %v114 = vpack.c.b16 %v99, %v98
    %v115 = vpack.c.b16 %v101, %v100
    %v116 = vpack.c.b16 %v103, %v102
    %v117 = vpack.c.b16 %v105, %v104
    %v118 = vpack.c.b16 %v107, %v106
    %v119 = vpack.c.b16 %v109, %v108
    %v120 = vpack.c.b16 %v111, %v110
    %v121 = vpack.c.b16 %v113, %v112
    %130 = vmatpush.bf16.msra.mxu0 %v121
    %131 = vmatpush.bf16.msra.mxu0 %v120
    %132 = vmatpush.bf16.msra.mxu0 %v119
    %133 = vmatpush.bf16.msra.mxu0 %v118
    %134 = vmatpush.bf16.msra.mxu0 %v117
    %135 = vmatpush.bf16.msra.mxu0 %v116
    %136 = vmatpush.bf16.msra.mxu0 %v115
    %137 = vmatpush.bf16.msra.mxu0 %v114
    %138 = vmatmul.bf16.gmra.mxu0 %v61
    %v139 = vpop.f32.mrf.mxu0
    %v140 = vadd.f32 %v80, %v139
    %v141 = vpop.f32.mrf.mxu0
    %142 = vdwg.mxu0
    %v143 = vmax.f32 %v140, 0.0
    %v144 = vld [vmem:[%s5] sm:$0x1]
    %v145 = vpack.c.bf16 %v143, %v143
    %v146 = vld [vmem:[#allocation2] sm:$0x1]
    %148 = vset.pattern.permute.xlu0 0
    %149 = vperm.xlu0 %148, %v146
    %v150 = vpop.permute.xlu0 %149
    %v152 = vperm.slane %v150, 0
    %153 = vmatpush.bf16.xpose.msra.mxu0 0
    %154 = vmatpush.bf16.xpose.msra.mxu0 0
    %155 = vmatpush.bf16.xpose.msra.mxu0 0
    %156 = vmatpush.bf16.xpose.msra.mxu0 0
    %157 = vmatpush.bf16.xpose.msra.mxu0 0
    %158 = vmatpush.bf16.xpose.msra.mxu0 0
    %159 = vmatpush.bf16.xpose.msra.mxu0 0
    %160 = vmatpush.bf16.xpose.msra.mxu0 %v145
    %161 = vmatmul.bf16.gmra.mxu0 %v144
    %v162 = vpop.f32.mrf.mxu0
    %v163 = vadd.f32 %v152, %v162
    %v164 = vpop.f32.mrf.mxu0
    %165 = vdwg.mxu0
    %vm166 = vcmask 57344
    %167 = vst.msk [vmem:[#allocation3] sm:$0x1] %vm166, %v163
    // Predicated region
    $region30: #{critic_forward.1} parent=1 // pred_check
      _
    $region31: #{critic_forward.1} parent=1 // pred_check_branch
      %169 = sbr.rel (0) target = $region33
    $region32: #{critic_forward.1} parent=1 // pred_region
      %171 = vsyncadd [#allocation4], 0
      %s173 = sshll.u32 [#allocation3], 4
      %s174 = int_to_ptr.vmem [resolvable:$true] %s173
      %s175 = sshll.u32 %s7, 4
      %s176 = int_to_ptr.hbm [resolvable:$true] %s175
      %178 = dma.vmem_to_hbm [thread:$0]  %s174, 16, %s176, [#allocation4]
    $region33: #{critic_forward.1} parent=1 // pred_fallthru
      _
    // Predicated region
    $region34: #{critic_forward.1} parent=1 // pred_check
      _
    $region35: #{critic_forward.1} parent=1 // pred_check_branch
      %180 = sbr.rel (0) target = $region37
    $region36: #{critic_forward.1} parent=1 // pred_region
      %182 = dma.done [#allocation4], 16
    $region37: #{critic_forward.1} parent=1 // pred_fallthru
      _
    %183 = vsyncpa [#allocation4], 1

</llo_original>
